<compile_context>
chip_gen: v6e
topology: v6e:2x2x1
jax: 0.10.0
libtpu: 0.0.40
codegen_flags: <defaults>
</compile_context>

<pallas_src>
import math
from functools import partial

import numpy as np
import jax
import jax.numpy as jnp
from jax.experimental import pallas as pl
from jax.experimental.pallas import tpu as pltpu


# ------------------------------ tiling helpers ------------------------------

TM_TARGET = 256   # row tile for matmul / layernorm
TN_TARGET = 256   # output-feature tile (multiple of 256 for v6e/v7x MXU)
TK_TARGET = 640   # reduction tile (divides 1280 / 5120 / 7680 at production sizes)


def _round_up(v, m):
    return ((v + m - 1) // m) * m


def _tile_and_pad(dim, target, mult):
    """Biggest tile <= target (multiple of `mult`) plus the padded dim size."""
    if dim >= target:
        return target, _round_up(dim, target)
    t = _round_up(dim, mult)
    return t, t


def _seq_tile(S, target=256):
    """Largest divisor of S that is a multiple of 8 and <= target (S itself if small)."""
    if S <= target:
        return S
    for t in range(target - target % 8, 7, -8):
        if S % t == 0:
            return t
    return S


# ----------------------------- Pallas kernels ------------------------------

_GELU_C = math.sqrt(2.0 / math.pi)


def _gelu_tanh(x):
    # TODO(synk): reference nn.GELU is exact (erf); tanh approximation is used in-kernel
    # (difference is below the bf16 matmul noise floor).
    return 0.5 * x * (1.0 + jnp.tanh(_GELU_C * (x + 0.044715 * x * x * x)))


def _linear_kernel(x_ref, wt_ref, b_ref, o_ref, acc_ref, *, activation):
    """Tiled y = act(x @ wt + b); K axis is grid axis 2 (accumulated in VMEM)."""
    k = pl.program_id(2)

    @pl.when(k == 0)
    def _():
        acc_ref[...] = jnp.zeros_like(acc_ref)

    acc_ref[...] += jnp.dot(x_ref[...], wt_ref[...],
                            preferred_element_type=jnp.float32)

    @pl.when(k == pl.num_programs(2) - 1)
    def _():
        y = acc_ref[...] + b_ref[...]
        if activation == "gelu":
            y = _gelu_tanh(y)
        o_ref[...] = y.astype(o_ref.dtype)


def _linear_residual_kernel(x_ref, wt_ref, b_ref, res_ref, g_ref, o_ref, acc_ref):
    """Tiled y = residual + gate * (x @ wt + b)  (residual/gate fused into epilogue)."""
    k = pl.program_id(2)

    @pl.when(k == 0)
    def _():
        acc_ref[...] = jnp.zeros_like(acc_ref)

    acc_ref[...] += jnp.dot(x_ref[...], wt_ref[...],
                            preferred_element_type=jnp.float32)

    @pl.when(k == pl.num_programs(2) - 1)
    def _():
        y = acc_ref[...] + b_ref[...]
        o_ref[...] = (res_ref[...] + g_ref[...] * y).astype(o_ref.dtype)


def pallas_linear(x, weight, bias=None, *, activation=None, residual=None, gate=None):
    """torch F.linear semantics: y = act(x @ weight.T + bias), weight is (N, K).

    Optionally y = residual + gate * y (fused residual add + gate scale).
    bf16 MXU inputs, f32 accumulation, (M, N, K) tiling.
    """
    orig_shape = x.shape
    K = orig_shape[-1]
    N = weight.shape[0]
    x2 = x.reshape(-1, K)
    M = x2.shape[0]

    TM, Mp = _tile_and_pad(M, TM_TARGET, 8)
    TN, Np = _tile_and_pad(N, TN_TARGET, 128)
    TK, Kp = _tile_and_pad(K, TK_TARGET, 128)

    x2 = x2.astype(jnp.bfloat16)
    if (Mp, Kp) != (M, K):
        x2 = jnp.pad(x2, ((0, Mp - M), (0, Kp - K)))
    wt = weight.T.astype(jnp.bfloat16)
    if (Kp, Np) != (K, N):
        wt = jnp.pad(wt, ((0, Kp - K), (0, Np - N)))
    b = bias if bias is not None else jnp.zeros((N,), jnp.float32)
    b2 = b.astype(jnp.float32).reshape(1, N)
    if Np != N:
        b2 = jnp.pad(b2, ((0, 0), (0, Np - N)))

    in_specs = [
        pl.BlockSpec((TM, TK), lambda i, j, k: (i, k)),
        pl.BlockSpec((TK, TN), lambda i, j, k: (k, j)),
        pl.BlockSpec((1, TN), lambda i, j, k: (0, j)),
    ]
    args = [x2, wt, b2]

    if residual is not None:
        if gate is None:
            gate = 1.0
        r2 = residual.reshape(-1, N).astype(jnp.float32)
        if (Mp, Np) != (M, N):
            r2 = jnp.pad(r2, ((0, Mp - M), (0, Np - N)))
        g = jnp.asarray(gate, dtype=jnp.float32).reshape(1, 1)
        in_specs += [
            pl.BlockSpec((TM, TN), lambda i, j, k: (i, j)),
            pl.BlockSpec((1, 1), lambda i, j, k: (0, 0)),
        ]
        args += [r2, g]
        kernel = _linear_residual_kernel
    else:
        kernel = partial(_linear_kernel, activation=activation)

    out = pl.pallas_call(
        kernel,
        out_shape=jax.ShapeDtypeStruct((Mp, Np), jnp.float32),
        grid_spec=pltpu.PrefetchScalarGridSpec(
            num_scalar_prefetch=0,
            grid=(Mp // TM, Np // TN, Kp // TK),
            in_specs=in_specs,
            out_specs=pl.BlockSpec((TM, TN), lambda i, j, k: (i, j)),
            scratch_shapes=[pltpu.VMEM((TM, TN), jnp.float32)],
        ),
        compiler_params=pltpu.CompilerParams(
            dimension_semantics=("parallel", "parallel", "arbitrary")),
    )(*args)
    return out[:M, :N].reshape(*orig_shape[:-1], N)


def _layernorm_kernel(x_ref, w_ref, b_ref, o_ref, *, eps):
    x = x_ref[...].astype(jnp.float32)
    mean = jnp.mean(x, axis=-1, keepdims=True)
    xc = x - mean
    var = jnp.mean(xc * xc, axis=-1, keepdims=True)
    y = xc * jax.lax.rsqrt(var + eps)
    o_ref[...] = (y * w_ref[...] + b_ref[...]).astype(o_ref.dtype)


def pallas_layernorm(x, weight, bias, eps=1e-5):
    orig_shape = x.shape
    D = orig_shape[-1]
    x2 = x.reshape(-1, D)
    M = x2.shape[0]
    TM, Mp = _tile_and_pad(M, TM_TARGET, 8)
    if Mp != M:
        x2 = jnp.pad(x2, ((0, Mp - M), (0, 0)))
    out = pl.pallas_call(
        partial(_layernorm_kernel, eps=eps),
        out_shape=jax.ShapeDtypeStruct((Mp, D), jnp.float32),
        grid_spec=pltpu.PrefetchScalarGridSpec(
            num_scalar_prefetch=0,
            grid=(Mp // TM,),
            in_specs=[
                pl.BlockSpec((TM, D), lambda i: (i, 0)),
                pl.BlockSpec((1, D), lambda i: (0, 0)),
                pl.BlockSpec((1, D), lambda i: (0, 0)),
            ],
            out_specs=pl.BlockSpec((TM, D), lambda i: (i, 0)),
        ),
        compiler_params=pltpu.CompilerParams(dimension_semantics=("parallel",)),
    )(x2, weight.reshape(1, D).astype(jnp.float32),
      bias.reshape(1, D).astype(jnp.float32))
    return out[:M].reshape(orig_shape)


def _flash_attn_kernel(nvalid_ref, tq_ref, tk_ref, q_ref, k_ref, v_ref, o_ref,
                       m_scr, l_scr, acc_scr, *, sm_scale):
    """Flash attention with the encoder mask regenerated in-kernel.

    Reference mask (build_encoder_attention_mask) adds -inf only where BOTH the query
    and the key token are padding positions; padding = (chunk beyond aspect-ratio valid
    chunks) or (within-chunk position beyond ntok).  tq/tk hold a per-token "chunk class"
    (chunk id, or num_chunks if the position itself is padding); a token is padding iff
    its class >= nvalid[b].
    """
    b = pl.program_id(0)
    ki = pl.program_id(3)

    @pl.when(ki == 0)
    def _():
        m_scr[...] = jnp.full_like(m_scr, -1e30)
        l_scr[...] = jnp.zeros_like(l_scr)
        acc_scr[...] = jnp.zeros_like(acc_scr)

    q = q_ref[0, 0]                      # (TQ, Dh) bf16
    k = k_ref[0, 0]                      # (TK, Dh) bf16
    v = v_ref[0, 0]                      # (TK, Dh) bf16

    s = jax.lax.dot_general(q, k, (((1,), (1,)), ((), ())),
                            preferred_element_type=jnp.float32) * sm_scale

    nvalid = nvalid_ref[b]
    q_bad = (tq_ref[...] >= nvalid).astype(jnp.float32)     # (TQ, 1)
    k_bad = (tk_ref[0] >= nvalid).astype(jnp.float32)       # (1, TK)
    s = s + q_bad * k_bad * (-1e30)      # additive mask, only where both are padding

    m_prev = m_scr[...]
    m_new = jnp.maximum(m_prev, jnp.max(s, axis=-1, keepdims=True))
    alpha = jnp.exp(m_prev - m_new)
    p = jnp.exp(s - m_new)
    l_scr[...] = alpha * l_scr[...] + jnp.sum(p, axis=-1, keepdims=True)
    acc_scr[...] = alpha * acc_scr[...] + jnp.dot(
        p.astype(jnp.bfloat16), v, preferred_element_type=jnp.float32)
    m_scr[...] = m_new

    @pl.when(ki == pl.num_programs(3) - 1)
    def _():
        o_ref[0, 0] = (acc_scr[...] * pl.reciprocal(l_scr[...], approx=True)
                       ).astype(o_ref.dtype)


def pallas_flash_attention(q, k, v, nvalid, *, ntok, ntok_pad):
    """q, k, v: (B, H, S, Dh); nvalid: (B,) int32 = valid chunks per batch element."""
    B, H, S, Dh = q.shape
    num_chunks = S // ntok_pad
    TQ = _seq_tile(S)
    TK = _seq_tile(S)
    nq, nk = S // TQ, S // TK

    pos = np.arange(S)
    tok_class = np.where(pos % ntok_pad < ntok, pos // ntok_pad,
                         num_chunks).astype(np.int32)
    tok_q = jnp.asarray(tok_class.reshape(S, 1))
    tok_k = jnp.asarray(tok_class.reshape(nk, 1, TK))

    q = q.astype(jnp.bfloat16)
    k = k.astype(jnp.bfloat16)
    v = v.astype(jnp.bfloat16)

    return pl.pallas_call(
        partial(_flash_attn_kernel, sm_scale=1.0 / math.sqrt(Dh)),
        out_shape=jax.ShapeDtypeStruct((B, H, S, Dh), jnp.float32),
        grid_spec=pltpu.PrefetchScalarGridSpec(
            num_scalar_prefetch=1,
            grid=(B, H, nq, nk),
            in_specs=[
                pl.BlockSpec((TQ, 1), lambda b, h, qi, ki, nv: (qi, 0)),
                pl.BlockSpec((1, 1, TK), lambda b, h, qi, ki, nv: (ki, 0, 0)),
                pl.BlockSpec((1, 1, TQ, Dh), lambda b, h, qi, ki, nv: (b, h, qi, 0)),
                pl.BlockSpec((1, 1, TK, Dh), lambda b, h, qi, ki, nv: (b, h, ki, 0)),
                pl.BlockSpec((1, 1, TK, Dh), lambda b, h, qi, ki, nv: (b, h, ki, 0)),
            ],
            out_specs=pl.BlockSpec((1, 1, TQ, Dh),
                                   lambda b, h, qi, ki, nv: (b, h, qi, 0)),
            scratch_shapes=[
                pltpu.VMEM((TQ, 1), jnp.float32),
                pltpu.VMEM((TQ, 1), jnp.float32),
                pltpu.VMEM((TQ, Dh), jnp.float32),
            ],
        ),
        compiler_params=pltpu.CompilerParams(
            dimension_semantics=("parallel", "parallel", "parallel", "arbitrary")),
    )(nvalid, tok_q, tok_k, q, k, v)


# ------------------------------- JAX glue ----------------------------------

def conv2d_patch(x_nchw, weight, patch_size):
    """ColumnParallelConv2dPatch: Unfold(kernel=stride=patch) + linear (no bias)."""
    N, C, H, W = x_nchw.shape
    P = patch_size
    gh, gw = H // P, W // P
    x = x_nchw.reshape(N, C, gh, P, gw, P)
    x = x.transpose(0, 2, 4, 1, 3, 5).reshape(N, gh * gw, C * P * P)  # (N, L, C*P*P)
    return pallas_linear(x, weight)                                    # (N, L, width)


def tile_position_embedding(x, ar_np, embedding, gate, num_tiles):
    # x: (B, num_chunks, ntok, width)
    B, _, _, width = x.shape
    out_pos = jnp.zeros((B, num_tiles, 1, width), dtype=x.dtype)
    for idx, (h, w) in enumerate(ar_np):
        h, w = int(h), int(w)
        emb = embedding[:h, :w].reshape(w * h, 1, width).astype(x.dtype)
        out_pos = out_pos.at[idx, : w * h].set(emb)
    out_pos = out_pos * jnp.tanh(gate)   # gated
    return x + out_pos


def apply_class_embedding(x, class_embedding):
    cls = jnp.broadcast_to(class_embedding.astype(x.dtype),
                           (x.shape[0], 1, x.shape[-1]))
    return jnp.concatenate([cls, x], axis=1)


def apply_positional_embedding(x, ar_np, positional_embedding,
                               gated_positional_embedding, gate):
    bsz, num_chunks, ntok, dim = x.shape
    g = jnp.tanh(gate)
    x = x + positional_embedding.astype(x.dtype) * (1 - g)
    for idx, (h, w) in enumerate(ar_np):
        h, w = int(h), int(w)
        pe = gated_positional_embedding[:h, :w].reshape(h * w, ntok, dim)
        x = x.at[idx, : h * w].add(pe.astype(x.dtype) * g)
    return x


def expand_num_tokens_to_mult8(x):
    npad = (8 - x.shape[-2] % 8) % 8
    if npad == 0:
        return x, 0
    pad = jnp.zeros(x.shape[:-2] + (npad, x.shape[-1]), dtype=x.dtype)
    return jnp.concatenate([x, pad], axis=-2), npad


def contract_num_tokens_from_mult8(x, npad):
    if npad == 0:
        return x
    return x[:, :, :-npad]


def image_attention(x, p, mask_info, residual, gate):
    nvalid, ntok, ntok_pad = mask_info
    bs, slen, dim = x.shape
    n_heads = p["n_heads"]
    head_dim = dim // n_heads
    # Fused Q/K/V projection (one tiled matmul instead of three).
    wqkv = jnp.concatenate([p["wq"], p["wk"], p["wv"]], axis=0)
    qkv = pallas_linear(x, wqkv)
    xq, xk, xv = jnp.split(qkv, 3, axis=-1)
    q = xq.reshape(bs, slen, n_heads, head_dim).transpose(0, 2, 1, 3)
    k = xk.reshape(bs, slen, n_heads, head_dim).transpose(0, 2, 1, 3)
    v = xv.reshape(bs, slen, n_heads, head_dim).transpose(0, 2, 1, 3)
    attn = pallas_flash_attention(q, k, v, nvalid, ntok=ntok, ntok_pad=ntok_pad)
    attn = attn.transpose(0, 2, 1, 3).reshape(bs, slen, dim)
    # wo with residual add + tanh(gate) scale fused in the epilogue
    # (qkvo_replication = 1, reduce = identity).
    return pallas_linear(attn, p["wo"], residual=residual, gate=gate)


def image_feed_forward(x, p, residual, gate):
    # TODO(synk): a fully-fused MLP (c_fc + GELU + c_proj in one kernel) would also keep
    # the 4x-wide hidden activation in VMEM; here GELU is fused into c_fc and the
    # residual+gate into c_proj.
    h = pallas_linear(x, p["c_fc_w"], p["c_fc_b"], activation="gelu")
    return pallas_linear(h, p["c_proj_w"], p["c_proj_b"], residual=residual, gate=gate)


def image_transformer_block(x, mask_info, p, gated):
    gate_attn = jnp.tanh(p["gate_attn"]) if gated else 1.0
    gate_ffn = jnp.tanh(p["gate_ffn"]) if gated else 1.0
    h = pallas_layernorm(x, p["ln1_w"], p["ln1_b"])
    x = image_attention(h, p, mask_info, residual=x, gate=gate_attn)
    h = pallas_layernorm(x, p["ln2_w"], p["ln2_b"])
    x = image_feed_forward(h, p, residual=x, gate=gate_ffn)
    return x


def image_transformer(x, mask_info, blocks, gated=False, return_intermediate=None):
    out = []
    for idx, p in enumerate(blocks):
        if return_intermediate is not None and idx in return_intermediate:
            out.append(x)
        x = image_transformer_block(x, mask_info, p, gated)
    if return_intermediate is not None:
        return x, jnp.stack(out, axis=-1)
    return x


def vision_encoder_forward(params, images, ar, cfg):
    if images.ndim == 5:
        num_concurrent_media = 1
        bsz, num_chunks, nch, w, h = images.shape
    else:
        bsz, num_concurrent_media, num_chunks, nch, w, h = images.shape
    ar_np = np.asarray(ar).reshape(bsz * num_concurrent_media, 2)
    images = images.reshape(bsz * num_concurrent_media * num_chunks, nch, w, h)

    x = conv2d_patch(images, params["conv1_w"], cfg["patch_size"])
    _, ntok, dim = x.shape

    x = x.reshape(bsz * num_concurrent_media, num_chunks, ntok, dim)
    x = tile_position_embedding(x, ar_np, params["pre_tile_emb"],
                                params["pre_tile_gate"], cfg["max_num_tiles"])
    x = x.reshape(bsz * num_concurrent_media * num_chunks, ntok, dim)
    x = apply_class_embedding(x, params["class_embedding"])
    ntok += 1

    x = x.reshape(bsz * num_concurrent_media, num_chunks, ntok, dim)
    x = apply_positional_embedding(x, ar_np, params["positional_embedding"],
                                   params["gated_positional_embedding"],
                                   params["gated_positional_embedding_gate"])
    x = pallas_layernorm(x, params["ln_pre_w"], params["ln_pre_b"])

    x, npad = expand_num_tokens_to_mult8(x)
    ntok_pad = ntok + npad
    # Mask metadata (replaces the (B,1,S,S) additive mask in HBM): per-batch number of
    # valid chunks; the rest is static and rebuilt in-kernel.
    nvalid = jnp.asarray([int(hh) * int(ww) for (hh, ww) in ar_np], dtype=jnp.int32)
    mask_info = (nvalid, ntok, ntok_pad)

    x = x.reshape(bsz * num_concurrent_media, -1, dim)

    x, int_x = image_transformer(x, mask_info, params["transformer"], gated=False,
                                 return_intermediate=cfg["return_intermediate"])
    x = pallas_layernorm(x, params["ln_post_w"], params["ln_post_b"])

    x = x.reshape(bsz * num_concurrent_media, num_chunks, ntok + npad, dim)
    x = tile_position_embedding(x, ar_np, params["post_tile_emb"],
                                params["post_tile_gate"], cfg["max_num_tiles"])
    x = x.reshape(bsz * num_concurrent_media, num_chunks * (ntok + npad), dim)
    x = image_transformer(x, mask_info, params["global_transformer"], gated=True)

    x = x.reshape(bsz * num_concurrent_media, num_chunks, ntok + npad, dim)
    x = contract_num_tokens_from_mult8(x, npad)
    x = x.reshape(bsz, num_concurrent_media, num_chunks, ntok, dim)

    int_x = int_x.reshape(bsz * num_concurrent_media, num_chunks, ntok + npad, -1)
    int_x = contract_num_tokens_from_mult8(int_x, npad)
    int_x = int_x.reshape(bsz, num_concurrent_media, num_chunks, ntok, -1)
    return jnp.concatenate([x, int_x], axis=-1)


def cross_attention_transformer_vision_forward(params, images, aspect_ratios, cfg):
    # Reference casts images to bf16 before the encoder; mirror the cast.
    images = images.astype(jnp.bfloat16).astype(jnp.float32)
    vision_tokens = vision_encoder_forward(params["vision_encoder"], images,
                                           aspect_ratios, cfg)
    # vision_projection (ColumnParallelLinear + gather, world_size=1 -> plain linear)
    return pallas_linear(vision_tokens, params["proj_w"], params["proj_b"])


# ----------------------------- parameter init ------------------------------

def init_params(key, cfg):
    width = cfg["width"]
    hidden = int(cfg["mlp_ratio"] * width)
    patch = cfg["patch_size"]
    grid = cfg["image_size"] // patch
    ntok1 = grid * grid + 1
    nt = cfg["max_num_tiles"]
    vision_input_dim = (len(cfg["return_intermediate"]) + 1) * width

    keys = iter(jax.random.split(key, 256))

    def nrm(shape, scale=0.05):
        return jax.random.normal(next(keys), shape, jnp.float32) * scale

    def block(gated):
        p = {
            "n_heads": cfg["heads"],
            "wq": nrm((width, width)), "wk": nrm((width, width)),
            "wv": nrm((width, width)), "wo": nrm((width, width)),
            "ln1_w": 1.0 + nrm((width,), 0.01), "ln1_b": nrm((width,), 0.01),
            "c_fc_w": nrm((hidden, width)), "c_fc_b": nrm((hidden,), 0.01),
            "c_proj_w": nrm((width, hidden)), "c_proj_b": nrm((width,), 0.01),
            "ln2_w": 1.0 + nrm((width,), 0.01), "ln2_b": nrm((width,), 0.01),
        }
        if gated:
            p["gate_attn"] = jnp.full((1,), 0.1, jnp.float32)
            p["gate_ffn"] = jnp.full((1,), 0.1, jnp.float32)
        return p

    scale = width ** (-0.5)
    enc = {
        "conv1_w": nrm((width, cfg["in_channels"] * patch * patch)),
        "class_embedding": nrm((width,), scale),
        "positional_embedding": nrm((ntok1, width), scale),
        "ln_pre_w": 1.0 + nrm((width,), 0.01), "ln_pre_b": nrm((width,), 0.01),
        "ln_post_w": 1.0 + nrm((width,), 0.01), "ln_post_b": nrm((width,), 0.01),
        "pre_tile_emb": nrm((nt, nt, 1, width), 1.0 / math.sqrt(width)),
        "pre_tile_gate": jnp.full((1,), 0.1, jnp.float32),
        "post_tile_emb": nrm((nt, nt, 1, width), 1.0 / math.sqrt(width)),
        "post_tile_gate": jnp.full((1,), 0.1, jnp.float32),
        "gated_positional_embedding": nrm((nt, nt, ntok1, width), scale),
        "gated_positional_embedding_gate": jnp.full((1,), 0.1, jnp.float32),
        "transformer": [block(False) for _ in range(cfg["layers"])],
        "global_transformer": [block(True) for _ in range(cfg["n_global_layers"])],
    }
    return {
        "vision_encoder": enc,
        "proj_w": nrm((cfg["out_dim"], vision_input_dim)),
        "proj_b": nrm((cfg["out_dim"],), 0.01),
    }


# ---------------------------------- main ------------------------------------

if __name__ == "__main__":
    cfg = dict(
        in_channels=3,
        image_size=16,            # scaled-down vision_chunk_size
        patch_size=4,             # -> 4x4 = 16 patches per chunk, +1 class token = 17
        width=32,
        heads=4,
        layers=4,                 # scaled-down local transformer
        n_global_layers=2,        # scaled-down global transformer
        mlp_ratio=4.0,
        max_num_tiles=4,
        return_intermediate=[1, 3],
        out_dim=64,               # args.dim
    )

    key = jax.random.PRNGKey(0)
    kp, ki = jax.random.split(key)
    params = init_params(kp, cfg)

    bsz, num_images, num_chunks = 1, 2, cfg["max_num_tiles"]
    images = jax.random.normal(
        ki, (bsz, num_images, num_chunks, cfg["in_channels"],
             cfg["image_size"], cfg["image_size"]), jnp.float32)
    aspect_ratios = jnp.array([[[1, 2], [2, 2]]], dtype=jnp.int32)  # (bsz, num_images, 2)

    out = cross_attention_transformer_vision_forward(params, images, aspect_ratios, cfg)
    out = jax.block_until_ready(out)

    ntok = (cfg["image_size"] // cfg["patch_size"]) ** 2 + 1
    expected = (bsz, num_images, num_chunks, ntok, cfg["out_dim"])
    assert out.shape == expected, (out.shape, expected)
    assert bool(jnp.all(jnp.isfinite(out)))
    print("KERNEL_OK")
</pallas_src>

<mosaic_0001>
module attributes {stable_mosaic.version = 11 : i64} {
  func.func @_linear_kernel(%arg0: i32, %arg1: i32, %arg2: i32, %arg3: memref<128x128xbf16, #tpu.memory_space<vmem>>, %arg4: memref<128x128xbf16, #tpu.memory_space<vmem>>, %arg5: memref<1x128xf32, #tpu.memory_space<vmem>>, %arg6: memref<128x128xf32, #tpu.memory_space<vmem>>, %arg7: memref<128x128xf32, #tpu.memory_space<vmem>>) attributes {dimension_semantics = [#tpu.dimension_semantics<parallel>, #tpu.dimension_semantics<parallel>, #tpu.dimension_semantics<arbitrary>], iteration_bounds = array<i64: 1, 1, 1>, scalar_prefetch = 0 : i64, scratch_operands = 1 : i64, tpu.core_type = #tpu.core_type<tc>, window_params = [{transform_indices = @transform_0, window_bounds = array<i64: 128, 128>}, {transform_indices = @transform_1, window_bounds = array<i64: 128, 128>}, {transform_indices = @transform_2, window_bounds = array<i64: 1, 128>}, {transform_indices = @transform_3, window_bounds = array<i64: 128, 128>}]} {
    %c0_i32 = arith.constant 0 : i32
    %0 = arith.cmpi eq, %arg2, %c0_i32 : i32
    %1 = arith.extui %0 : i1 to i32
    %c0_i32_0 = arith.constant 0 : i32
    %2 = arith.cmpi ne, %1, %c0_i32_0 : i32
    scf.if %2 {
      %cst_10 = arith.constant 0.000000e+00 : f32
      %12 = vector.broadcast %cst_10 : f32 to vector<128x128xf32>
      %c0_11 = arith.constant 0 : index
      %c0_12 = arith.constant 0 : index
      %13 = vector.load %arg7[%c0_11, %c0_12] : memref<128x128xf32, #tpu.memory_space<vmem>>, vector<128x128xf32>
      tpu.vector_store %arg7[%c0_11, %c0_12], %12 {strides = array<i32>} : memref<128x128xf32, #tpu.memory_space<vmem>>, vector<128x128xf32>,
    } else {
    }
    %c0 = arith.constant 0 : index
    %c0_1 = arith.constant 0 : index
    %3 = vector.load %arg7[%c0, %c0_1] : memref<128x128xf32, #tpu.memory_space<vmem>>, vector<128x128xf32>
    %c0_2 = arith.constant 0 : index
    %c0_3 = arith.constant 0 : index
    %4 = vector.load %arg3[%c0_2, %c0_3] : memref<128x128xbf16, #tpu.memory_space<vmem>>, vector<128x128xbf16>
    %c0_4 = arith.constant 0 : index
    %c0_5 = arith.constant 0 : index
    %5 = vector.load %arg4[%c0_4, %c0_5] : memref<128x128xbf16, #tpu.memory_space<vmem>>, vector<128x128xbf16>
    %cst = arith.constant dense<0.000000e+00> : vector<128x128xf32>
    %6 = tpu.matmul %4, %5, %cst {dimension_numbers = #tpu.dot_dimension_numbers<[1], [0], [0], [1], [0, 0, 1, 1], [], []>} : vector<128x128xbf16>, vector<128x128xbf16>, vector<128x128xf32> -> vector<128x128xf32>
    %7 = arith.addf %3, %6 : vector<128x128xf32>
    %c0_6 = arith.constant 0 : index
    %c0_7 = arith.constant 0 : index
    %8 = vector.load %arg7[%c0_6, %c0_7] : memref<128x128xf32, #tpu.memory_space<vmem>>, vector<128x128xf32>
    tpu.vector_store %arg7[%c0_6, %c0_7], %7 {strides = array<i32>} : memref<128x128xf32, #tpu.memory_space<vmem>>, vector<128x128xf32>,
    %c0_i32_8 = arith.constant 0 : i32
    %9 = arith.cmpi eq, %arg2, %c0_i32_8 : i32
    %10 = arith.extui %9 : i1 to i32
    %c0_i32_9 = arith.constant 0 : i32
    %11 = arith.cmpi ne, %10, %c0_i32_9 : i32
    scf.if %11 {
      %c0_10 = arith.constant 0 : index
      %c0_11 = arith.constant 0 : index
      %12 = vector.load %arg7[%c0_10, %c0_11] : memref<128x128xf32, #tpu.memory_space<vmem>>, vector<128x128xf32>
      %c0_12 = arith.constant 0 : index
      %c0_13 = arith.constant 0 : index
      %13 = vector.load %arg5[%c0_12, %c0_13] : memref<1x128xf32, #tpu.memory_space<vmem>>, vector<1x128xf32>
      %14 = vector.broadcast %13 : vector<1x128xf32> to vector<128x128xf32>
      %15 = arith.addf %12, %14 : vector<128x128xf32>
      %c0_14 = arith.constant 0 : index
      %c0_15 = arith.constant 0 : index
      %16 = vector.load %arg6[%c0_14, %c0_15] : memref<128x128xf32, #tpu.memory_space<vmem>>, vector<128x128xf32>
      tpu.vector_store %arg6[%c0_14, %c0_15], %15 {strides = array<i32>} : memref<128x128xf32, #tpu.memory_space<vmem>>, vector<128x128xf32>,
    } else {
    }
    return
  }
  func.func @transform_0(%arg0: i32, %arg1: i32, %arg2: i32) -> (i32, i32) {
    %c0_i32 = arith.constant 0 : i32
    return %arg0, %arg2 : i32, i32
  }
  func.func @transform_1(%arg0: i32, %arg1: i32, %arg2: i32) -> (i32, i32) {
    %c0_i32 = arith.constant 0 : i32
    return %arg2, %arg1 : i32, i32
  }
  func.func @transform_2(%arg0: i32, %arg1: i32, %arg2: i32) -> (i32, i32) {
    %c0_i32 = arith.constant 0 : i32
    %c0_i32_0 = arith.constant 0 : i32
    return %c0_i32, %arg1 : i32, i32
  }
  func.func @transform_3(%arg0: i32, %arg1: i32, %arg2: i32) -> (i32, i32) {
    %c0_i32 = arith.constant 0 : i32
    return %arg0, %arg1 : i32, i32
  }
}

</mosaic_0001>

<llo_original>
// kernel: tpu_custom_call.1
$region0: #{tpu_custom_call.1}
  #allocation0 [shape = 'u32[]', space=smem, size = 0x4, offset = 0x4, fixed_abs, tag = 'smem constant byte address 0x4 - core index']
  #allocation1 [shape = 'u32[144,128]{1,0:T(1,128)}', space=vmem, size = 0x12000, scoped, tag = 'internal scratch']
  #allocation2 [shape = 'f32[128,128]{1,0:T(8,128)}', space=vmem, size = 0x10000, scoped, tag = 'scratch operand']
  %s0 = inlined_call_operand.hbm [shape: bf16[128,128], index: 0, kind: input, shape index: {}]
  %s1 = inlined_call_operand.hbm [shape: bf16[128,128], index: 1, kind: input, shape index: {}]
  %s2 = inlined_call_operand.vmem [shape: f32[1,128], index: 2, kind: input, shape index: {}]
  %s3 = inlined_call_operand.hbm [shape: f32[128,128], index: 3, kind: output, shape index: {}]
  %s4 = sld [smem:[#allocation0]]
  $region38: #{tpu_custom_call.1} parent=0
    _
  %s6 = ssub.s32 1, %s4
  %s7 = scalar_select 0, %s6, %s4
  $region1: #{tpu_custom_call.1} parent=0
    #allocation3 [shape = 'u8[32768]{0}', space=vmem, size = 0x8000, scoped, tag = 'input window, operand 0, single buffered']
    #allocation4 [shape = 's32[1]{0}', space=sflag, size = 0x4, scoped, tag = 'scoped memory for tpu_custom_call.1']
    #allocation5 [shape = 's32[1]{0}', space=sflag, size = 0x4, scoped, tag = 'scoped memory for tpu_custom_call.1']
    #allocation6 [shape = 'u8[32768]{0}', space=vmem, size = 0x8000, scoped, tag = 'input window, operand 1, single buffered']
    #allocation7 [shape = 's32[1]{0}', space=sflag, size = 0x4, scoped, tag = 'scoped memory for tpu_custom_call.1']
    #allocation8 [shape = 'u8[65536]{0}', space=vmem, size = 0x10000, scoped, tag = 'output window, operand 0, single buffered']
    %8 = vsyncpa [#allocation4], 0
    %9 = vsyncpa [#allocation7], 0
    %10 = vsyncpa [#allocation5], 0
    // Predicated region
    $region2: #{tpu_custom_call.1} parent=1 // pred_check
      _
    $region3: #{tpu_custom_call.1} parent=1 // pred_check_branch
      %12 = sbr.rel (0) target = $region5
    $region4: #{tpu_custom_call.1} parent=1 // pred_region
      %s14 = ssub.s32 1024, 1024
      %15 = vsyncadd [#allocation4], %s14
      %s16 = sshll.u32 [#allocation3], 4
      %s17 = int_to_ptr.vmem [resolvable:$true] %s16
      %22 = dma.hbm_to_vmem [thread:$0]  %s0, 1024, %s17, [#allocation4], 64, 64, 4
    $region5: #{tpu_custom_call.1} parent=1 // pred_fallthru
      _
    // Predicated region
    $region6: #{tpu_custom_call.1} parent=1 // pred_check
      _
    $region7: #{tpu_custom_call.1} parent=1 // pred_check_branch
      %24 = sbr.rel (0) target = $region9
    $region8: #{tpu_custom_call.1} parent=1 // pred_region
      %s26 = ssub.s32 1024, 1024
      %27 = vsyncadd [#allocation7], %s26
      %s28 = sshll.u32 [#allocation6], 4
      %s29 = int_to_ptr.vmem [resolvable:$true] %s28
      %34 = dma.hbm_to_vmem [thread:$0]  %s1, 1024, %s29, [#allocation7], 64, 64, 4
    $region9: #{tpu_custom_call.1} parent=1 // pred_fallthru
      _
    // Predicated region
    $region10: #{tpu_custom_call.1} parent=1 // pred_check
      _
    $region11: #{tpu_custom_call.1} parent=1 // pred_check_branch
      %36 = sbr.rel (0) target = $region13
    $region12: #{tpu_custom_call.1} parent=1 // pred_region
      _
    $region13: #{tpu_custom_call.1} parent=1 // pred_fallthru
      _
    // Predicated region
    $region14: #{tpu_custom_call.1} parent=1 // pred_check
      _
    $region15: #{tpu_custom_call.1} parent=1 // pred_check_branch
      %38 = sbr.rel (0) target = $region17
    $region16: #{tpu_custom_call.1} parent=1 // pred_region
      %39 = dma.done [#allocation4], 1024
    $region17: #{tpu_custom_call.1} parent=1 // pred_fallthru
      _
    // Predicated region
    $region18: #{tpu_custom_call.1} parent=1 // pred_check
      _
    $region19: #{tpu_custom_call.1} parent=1 // pred_check_branch
      %41 = sbr.rel (0) target = $region21
    $region20: #{tpu_custom_call.1} parent=1 // pred_region
      %42 = dma.done [#allocation7], 1024
    $region21: #{tpu_custom_call.1} parent=1 // pred_fallthru
      _
    %p44 = scmp.eq.s32.totalorder 0, 0
    // Predicated region
    $region22: #{tpu_custom_call.1} parent=1 // pred_check
      %p45 = pneg %p44
    $region23: #{tpu_custom_call.1} parent=1 // pred_check_branch
      %47 = sbr.rel (%p45) target = $region25
    $region24: #{tpu_custom_call.1} parent=1 // pred_region
      %48 = vst [vmem:[#allocation2] sm:$0xff] 0.0
      %49 = vst [vmem:[#allocation2 + $0x8] sm:$0xff] 0.0
      %50 = vst [vmem:[#allocation2 + $0x10] sm:$0xff] 0.0
      %51 = vst [vmem:[#allocation2 + $0x18] sm:$0xff] 0.0
      %52 = vst [vmem:[#allocation2 + $0x20] sm:$0xff] 0.0
      %53 = vst [vmem:[#allocation2 + $0x28] sm:$0xff] 0.0
      %54 = vst [vmem:[#allocation2 + $0x30] sm:$0xff] 0.0
      %55 = vst [vmem:[#allocation2 + $0x38] sm:$0xff] 0.0
      %56 = vst [vmem:[#allocation2 + $0x40] sm:$0xff] 0.0
      %57 = vst [vmem:[#allocation2 + $0x48] sm:$0xff] 0.0
      %58 = vst [vmem:[#allocation2 + $0x50] sm:$0xff] 0.0
      %59 = vst [vmem:[#allocation2 + $0x58] sm:$0xff] 0.0
      %60 = vst [vmem:[#allocation2 + $0x60] sm:$0xff] 0.0
      %61 = vst [vmem:[#allocation2 + $0x68] sm:$0xff] 0.0
      %62 = vst [vmem:[#allocation2 + $0x70] sm:$0xff] 0.0
      %63 = vst [vmem:[#allocation2 + $0x78] sm:$0xff] 0.0
    $region25: #{tpu_custom_call.1} parent=1 // pred_fallthru
      _
    %v64 = vld [vmem:[#allocation2] sm:$0xff]
    %v65 = vld [vmem:[#allocation2 + $0x8] sm:$0xff]
    %v66 = vld [vmem:[#allocation2 + $0x10] sm:$0xff]
    %v67 = vld [vmem:[#allocation2 + $0x18] sm:$0xff]
    %v68 = vld [vmem:[#allocation2 + $0x20] sm:$0xff]
    %v69 = vld [vmem:[#allocation2 + $0x28] sm:$0xff]
    %v70 = vld [vmem:[#allocation2 + $0x30] sm:$0xff]
    %v71 = vld [vmem:[#allocation2 + $0x38] sm:$0xff]
    %v72 = vld [vmem:[#allocation2 + $0x40] sm:$0xff]
    %v73 = vld [vmem:[#allocation2 + $0x48] sm:$0xff]
    %v74 = vld [vmem:[#allocation2 + $0x50] sm:$0xff]
    %v75 = vld [vmem:[#allocation2 + $0x58] sm:$0xff]
    %v76 = vld [vmem:[#allocation2 + $0x60] sm:$0xff]
    %v77 = vld [vmem:[#allocation2 + $0x68] sm:$0xff]
    %v78 = vld [vmem:[#allocation2 + $0x70] sm:$0xff]
    %v79 = vld [vmem:[#allocation2 + $0x78] sm:$0xff]
    %v80 = vld [vmem:[#allocation3] sm:$0xf]
    %v81 = vld [vmem:[#allocation3 + $0x4] sm:$0xf]
    %v82 = vld [vmem:[#allocation3 + $0x8] sm:$0xf]
    %v83 = vld [vmem:[#allocation3 + $0xc] sm:$0xf]
    %v84 = vld [vmem:[#allocation3 + $0x10] sm:$0xf]
    %v85 = vld [vmem:[#allocation3 + $0x14] sm:$0xf]
    %v86 = vld [vmem:[#allocation3 + $0x18] sm:$0xf]
    %v87 = vld [vmem:[#allocation3 + $0x1c] sm:$0xf]
    %v88 = vld [vmem:[#allocation3 + $0x20] sm:$0xf]
    %v89 = vld [vmem:[#allocation3 + $0x24] sm:$0xf]
    %v90 = vld [vmem:[#allocation3 + $0x28] sm:$0xf]
    %v91 = vld [vmem:[#allocation3 + $0x2c] sm:$0xf]
    %v92 = vld [vmem:[#allocation3 + $0x30] sm:$0xf]
    %v93 = vld [vmem:[#allocation3 + $0x34] sm:$0xf]
    %v94 = vld [vmem:[#allocation3 + $0x38] sm:$0xf]
    %v95 = vld [vmem:[#allocation3 + $0x3c] sm:$0xf]
    %v96 = vld [vmem:[#allocation6] sm:$0xf]
    %v97 = vld [vmem:[#allocation6 + $0x4] sm:$0xf]
    %v98 = vld [vmem:[#allocation6 + $0x8] sm:$0xf]
    %v99 = vld [vmem:[#allocation6 + $0xc] sm:$0xf]
    %v100 = vld [vmem:[#allocation6 + $0x10] sm:$0xf]
    %v101 = vld [vmem:[#allocation6 + $0x14] sm:$0xf]
    %v102 = vld [vmem:[#allocation6 + $0x18] sm:$0xf]
    %v103 = vld [vmem:[#allocation6 + $0x1c] sm:$0xf]
    %v104 = vld [vmem:[#allocation6 + $0x20] sm:$0xf]
    %v105 = vld [vmem:[#allocation6 + $0x24] sm:$0xf]
    %v106 = vld [vmem:[#allocation6 + $0x28] sm:$0xf]
    %v107 = vld [vmem:[#allocation6 + $0x2c] sm:$0xf]
    %v108 = vld [vmem:[#allocation6 + $0x30] sm:$0xf]
    %v109 = vld [vmem:[#allocation6 + $0x34] sm:$0xf]
    %v110 = vld [vmem:[#allocation6 + $0x38] sm:$0xf]
    %v111 = vld [vmem:[#allocation6 + $0x3c] sm:$0xf]
    %v128 = vunpack.c.l.b16 %v80
    %v129 = vunpack.c.l.b16 %v81
    %v130 = vunpack.c.l.b16 %v82
    %v131 = vunpack.c.l.b16 %v83
    %v132 = vunpack.c.l.b16 %v84
    %v133 = vunpack.c.l.b16 %v85
    %v134 = vunpack.c.l.b16 %v86
    %v135 = vunpack.c.l.b16 %v87
    %v136 = vunpack.c.l.b16 %v88
    %v137 = vunpack.c.l.b16 %v89
    %v138 = vunpack.c.l.b16 %v90
    %v139 = vunpack.c.l.b16 %v91
    %v140 = vunpack.c.l.b16 %v92
    %v141 = vunpack.c.l.b16 %v93
    %v142 = vunpack.c.l.b16 %v94
    %v143 = vunpack.c.l.b16 %v95
    %v144 = vpack.c.b16 %v129, %v128
    %v145 = vpack.c.b16 %v131, %v130
    %v146 = vpack.c.b16 %v133, %v132
    %v147 = vpack.c.b16 %v135, %v134
    %v148 = vpack.c.b16 %v137, %v136
    %v149 = vpack.c.b16 %v139, %v138
    %v150 = vpack.c.b16 %v141, %v140
    %v151 = vpack.c.b16 %v143, %v142
    %v176 = vunpack.c.l.b16 %v96
    %v177 = vunpack.c.l.b16 %v97
    %v178 = vunpack.c.l.b16 %v98
    %v179 = vunpack.c.l.b16 %v99
    %v180 = vunpack.c.l.b16 %v100
    %v181 = vunpack.c.l.b16 %v101
    %v182 = vunpack.c.l.b16 %v102
    %v183 = vunpack.c.l.b16 %v103
    %v184 = vunpack.c.l.b16 %v104
    %v185 = vunpack.c.l.b16 %v105
    %v186 = vunpack.c.l.b16 %v106
    %v187 = vunpack.c.l.b16 %v107
    %v188 = vunpack.c.l.b16 %v108
    %v189 = vunpack.c.l.b16 %v109
    %v190 = vunpack.c.l.b16 %v110
    %v191 = vunpack.c.l.b16 %v111
    %v192 = vpack.c.b16 %v177, %v176
    %v193 = vpack.c.b16 %v179, %v178
    %v194 = vpack.c.b16 %v181, %v180
    %v195 = vpack.c.b16 %v183, %v182
    %v196 = vpack.c.b16 %v185, %v184
    %v197 = vpack.c.b16 %v187, %v186
    %v198 = vpack.c.b16 %v189, %v188
    %v199 = vpack.c.b16 %v191, %v190
    %208 = vmatprep.subr.bf16.mxu0 0
    %209 = vmatpush1.bf16.msra.mxu0 %v199
    %210 = vmatprep.subr.bf16.mxu0 0
    %211 = vmatpush1.bf16.msra.mxu0 %v198
    %212 = vmatprep.subr.bf16.mxu0 0
    %213 = vmatpush1.bf16.msra.mxu0 %v197
    %214 = vmatprep.subr.bf16.mxu0 0
    %215 = vmatpush1.bf16.msra.mxu0 %v196
    %216 = vmatprep.subr.bf16.mxu0 0
    %217 = vmatpush1.bf16.msra.mxu0 %v195
    %218 = vmatprep.subr.bf16.mxu0 0
    %219 = vmatpush1.bf16.msra.mxu0 %v194
    %220 = vmatprep.subr.bf16.mxu0 0
    %221 = vmatpush1.bf16.msra.mxu0 %v193
    %222 = vmatprep.subr.bf16.mxu0 0
    %223 = vmatpush1.bf16.msra.mxu0 %v192
    %224 = vmatprep.subr.bf16.mxu0 0
    %225 = vmatpush2.bf16.msra.mxu0 0
    %226 = vmatprep.subr.bf16.mxu0 0
    %227 = vmatpush2.bf16.msra.mxu0 0
    %228 = vmatprep.subr.bf16.mxu0 0
    %229 = vmatpush2.bf16.msra.mxu0 0
    %230 = vmatprep.subr.bf16.mxu0 0
    %231 = vmatpush2.bf16.msra.mxu0 0
    %232 = vmatprep.subr.bf16.mxu0 0
    %233 = vmatpush2.bf16.msra.mxu0 0
    %234 = vmatprep.subr.bf16.mxu0 0
    %235 = vmatpush2.bf16.msra.mxu0 0
    %236 = vmatprep.subr.bf16.mxu0 0
    %237 = vmatpush2.bf16.msra.mxu0 0
    %238 = vmatprep.subr.bf16.mxu0 0
    %239 = vmatpush2.bf16.msra.mxu0 0
    %240 = vmatprep.mubr.bf16.mxu0 0
    %241 = vmatmul.mubr.bf16.gmra.mxu0 %v144
    %v242 = vpop.f32.mrf.mxu0
    %v243 = vadd.f32 0.0, %v242
    %v244 = vpop.f32.mrf.mxu0
    %v245 = vpop.f32.mrf.mxu0
    %v246 = vadd.f32 0.0, %v245
    %v247 = vpop.f32.mrf.mxu0
    %248 = vmatprep.mubr.bf16.mxu0 0
    %249 = vmatmul.mubr.bf16.gmra.mxu0 %v145
    %v250 = vpop.f32.mrf.mxu0
    %v251 = vadd.f32 0.0, %v250
    %v252 = vpop.f32.mrf.mxu0
    %v253 = vpop.f32.mrf.mxu0
    %v254 = vadd.f32 0.0, %v253
    %v255 = vpop.f32.mrf.mxu0
    %256 = vmatprep.mubr.bf16.mxu0 0
    %257 = vmatmul.mubr.bf16.gmra.mxu0 %v146
    %v258 = vpop.f32.mrf.mxu0
    %v259 = vadd.f32 0.0, %v258
    %v260 = vpop.f32.mrf.mxu0
    %v261 = vpop.f32.mrf.mxu0
    %v262 = vadd.f32 0.0, %v261
    %v263 = vpop.f32.mrf.mxu0
    %264 = vmatprep.mubr.bf16.mxu0 0
    %265 = vmatmul.mubr.bf16.gmra.mxu0 %v147
    %v266 = vpop.f32.mrf.mxu0
    %v267 = vadd.f32 0.0, %v266
    %v268 = vpop.f32.mrf.mxu0
    %v269 = vpop.f32.mrf.mxu0
    %v270 = vadd.f32 0.0, %v269
    %v271 = vpop.f32.mrf.mxu0
    %272 = vmatprep.mubr.bf16.mxu0 0
    %273 = vmatmul.mubr.bf16.gmra.mxu0 %v148
    %v274 = vpop.f32.mrf.mxu0
    %v275 = vadd.f32 0.0, %v274
    %v276 = vpop.f32.mrf.mxu0
    %v277 = vpop.f32.mrf.mxu0
    %v278 = vadd.f32 0.0, %v277
    %v279 = vpop.f32.mrf.mxu0
    %280 = vmatprep.mubr.bf16.mxu0 0
    %281 = vmatmul.mubr.bf16.gmra.mxu0 %v149
    %v282 = vpop.f32.mrf.mxu0
    %v283 = vadd.f32 0.0, %v282
    %v284 = vpop.f32.mrf.mxu0
    %v285 = vpop.f32.mrf.mxu0
    %v286 = vadd.f32 0.0, %v285
    %v287 = vpop.f32.mrf.mxu0
    %288 = vmatprep.mubr.bf16.mxu0 0
    %289 = vmatmul.mubr.bf16.gmra.mxu0 %v150
    %v290 = vpop.f32.mrf.mxu0
    %v291 = vadd.f32 0.0, %v290
    %v292 = vpop.f32.mrf.mxu0
    %v293 = vpop.f32.mrf.mxu0
    %v294 = vadd.f32 0.0, %v293
    %v295 = vpop.f32.mrf.mxu0
    %296 = vmatprep.mubr.bf16.mxu0 0
    %297 = vmatmul.mubr.bf16.gmra.mxu0 %v151
    %v298 = vpop.f32.mrf.mxu0
    %v299 = vadd.f32 0.0, %v298
    %v300 = vpop.f32.mrf.mxu0
    %v301 = vpop.f32.mrf.mxu0
    %v302 = vadd.f32 0.0, %v301
    %v303 = vpop.f32.mrf.mxu0
    %304 = vdwg.mxu0
    %v305 = vadd.f32 %v64, %v243
    %v306 = vadd.f32 %v65, %v246
    %v307 = vadd.f32 %v66, %v251
    %v308 = vadd.f32 %v67, %v254
    %v309 = vadd.f32 %v68, %v259
    %v310 = vadd.f32 %v69, %v262
    %v311 = vadd.f32 %v70, %v267
    %v312 = vadd.f32 %v71, %v270
    %v313 = vadd.f32 %v72, %v275
    %v314 = vadd.f32 %v73, %v278
    %v315 = vadd.f32 %v74, %v283
    %v316 = vadd.f32 %v75, %v286
    %v317 = vadd.f32 %v76, %v291
    %v318 = vadd.f32 %v77, %v294
    %v319 = vadd.f32 %v78, %v299
    %v320 = vadd.f32 %v79, %v302
    %321 = vst [vmem:[#allocation2] sm:$0xff] %v305
    %322 = vst [vmem:[#allocation2 + $0x8] sm:$0xff] %v306
    %323 = vst [vmem:[#allocation2 + $0x10] sm:$0xff] %v307
    %324 = vst [vmem:[#allocation2 + $0x18] sm:$0xff] %v308
    %325 = vst [vmem:[#allocation2 + $0x20] sm:$0xff] %v309
    %326 = vst [vmem:[#allocation2 + $0x28] sm:$0xff] %v310
    %327 = vst [vmem:[#allocation2 + $0x30] sm:$0xff] %v311
    %328 = vst [vmem:[#allocation2 + $0x38] sm:$0xff] %v312
    %329 = vst [vmem:[#allocation2 + $0x40] sm:$0xff] %v313
    %330 = vst [vmem:[#allocation2 + $0x48] sm:$0xff] %v314
    %331 = vst [vmem:[#allocation2 + $0x50] sm:$0xff] %v315
    %332 = vst [vmem:[#allocation2 + $0x58] sm:$0xff] %v316
    %333 = vst [vmem:[#allocation2 + $0x60] sm:$0xff] %v317
    %334 = vst [vmem:[#allocation2 + $0x68] sm:$0xff] %v318
    %335 = vst [vmem:[#allocation2 + $0x70] sm:$0xff] %v319
    %336 = vst [vmem:[#allocation2 + $0x78] sm:$0xff] %v320
    // Predicated region
    $region26: #{tpu_custom_call.1} parent=1 // pred_check
      %p337 = pneg %p44
    $region27: #{tpu_custom_call.1} parent=1 // pred_check_branch
      %339 = sbr.rel (%p337) target = $region29
    $region28: #{tpu_custom_call.1} parent=1 // pred_region
      %v340 = vld [vmem:[#allocation2] sm:$0xff]
      %v341 = vld [vmem:[#allocation2 + $0x8] sm:$0xff]
      %v342 = vld [vmem:[#allocation2 + $0x10] sm:$0xff]
      %v343 = vld [vmem:[#allocation2 + $0x18] sm:$0xff]
      %v344 = vld [vmem:[#allocation2 + $0x20] sm:$0xff]
      %v345 = vld [vmem:[#allocation2 + $0x28] sm:$0xff]
      %v346 = vld [vmem:[#allocation2 + $0x30] sm:$0xff]
      %v347 = vld [vmem:[#allocation2 + $0x38] sm:$0xff]
      %v348 = vld [vmem:[#allocation2 + $0x40] sm:$0xff]
      %v349 = vld [vmem:[#allocation2 + $0x48] sm:$0xff]
      %v350 = vld [vmem:[#allocation2 + $0x50] sm:$0xff]
      %v351 = vld [vmem:[#allocation2 + $0x58] sm:$0xff]
      %v352 = vld [vmem:[#allocation2 + $0x60] sm:$0xff]
      %v353 = vld [vmem:[#allocation2 + $0x68] sm:$0xff]
      %v354 = vld [vmem:[#allocation2 + $0x70] sm:$0xff]
      %v355 = vld [vmem:[#allocation2 + $0x78] sm:$0xff]
      %v356 = vld [vmem:[%s2] sm:$0x1]
      %v358 = vlaneseq
      %v359 = vshrl.u32 %v358, 7
      %v360 = vsub.s32 0, %v359
      %v361 = vrot.slane %v356, %v360
      %v363 = vadd.f32 %v340, %v361
      %v364 = vadd.f32 %v341, %v361
      %v365 = vadd.f32 %v342, %v361
      %v366 = vadd.f32 %v343, %v361
      %v367 = vadd.f32 %v344, %v361
      %v368 = vadd.f32 %v345, %v361
      %v369 = vadd.f32 %v346, %v361
      %v370 = vadd.f32 %v347, %v361
      %v371 = vadd.f32 %v348, %v361
      %v372 = vadd.f32 %v349, %v361
      %v373 = vadd.f32 %v350, %v361
      %v374 = vadd.f32 %v351, %v361
      %v375 = vadd.f32 %v352, %v361
      %v376 = vadd.f32 %v353, %v361
      %v377 = vadd.f32 %v354, %v361
      %v378 = vadd.f32 %v355, %v361
      %379 = vst [vmem:[#allocation8] sm:$0xff] %v363
      %380 = vst [vmem:[#allocation8 + $0x8] sm:$0xff] %v364
      %381 = vst [vmem:[#allocation8 + $0x10] sm:$0xff] %v365
      %382 = vst [vmem:[#allocation8 + $0x18] sm:$0xff] %v366
      %383 = vst [vmem:[#allocation8 + $0x20] sm:$0xff] %v367
      %384 = vst [vmem:[#allocation8 + $0x28] sm:$0xff] %v368
      %385 = vst [vmem:[#allocation8 + $0x30] sm:$0xff] %v369
      %386 = vst [vmem:[#allocation8 + $0x38] sm:$0xff] %v370
      %387 = vst [vmem:[#allocation8 + $0x40] sm:$0xff] %v371
      %388 = vst [vmem:[#allocation8 + $0x48] sm:$0xff] %v372
      %389 = vst [vmem:[#allocation8 + $0x50] sm:$0xff] %v373
      %390 = vst [vmem:[#allocation8 + $0x58] sm:$0xff] %v374
      %391 = vst [vmem:[#allocation8 + $0x60] sm:$0xff] %v375
      %392 = vst [vmem:[#allocation8 + $0x68] sm:$0xff] %v376
      %393 = vst [vmem:[#allocation8 + $0x70] sm:$0xff] %v377
      %394 = vst [vmem:[#allocation8 + $0x78] sm:$0xff] %v378
    $region29: #{tpu_custom_call.1} parent=1 // pred_fallthru
      _
    // Predicated region
    $region30: #{tpu_custom_call.1} parent=1 // pred_check
      _
    $region31: #{tpu_custom_call.1} parent=1 // pred_check_branch
      %396 = sbr.rel (0) target = $region33
    $region32: #{tpu_custom_call.1} parent=1 // pred_region
      %s398 = ssub.s32 2048, 2048
      %399 = vsyncadd [#allocation5], %s398
      %s400 = sshll.u32 [#allocation8], 4
      %s401 = int_to_ptr.vmem [resolvable:$true] %s400
      %406 = dma.vmem_to_hbm [thread:$0]  %s401, 2048, %s3, [#allocation5], 128, 128, 8
    $region33: #{tpu_custom_call.1} parent=1 // pred_fallthru
      _
    // Predicated region
    $region34: #{tpu_custom_call.1} parent=1 // pred_check
      _
    $region35: #{tpu_custom_call.1} parent=1 // pred_check_branch
      %408 = sbr.rel (0) target = $region37
    $region36: #{tpu_custom_call.1} parent=1 // pred_region
      %409 = dma.done [#allocation5], 2048
    $region37: #{tpu_custom_call.1} parent=1 // pred_fallthru
      _
    %410 = vsyncpa [#allocation4], 1
    %411 = vsyncpa [#allocation7], 1
    %412 = vsyncpa [#allocation5], 1

</llo_original>
